<compile_context>
chip_gen: v6e
topology: v6e:2x2x1
jax: 0.10.0
libtpu: 0.0.40
codegen_flags: <defaults>
</compile_context>

<pallas_src>
import functools

import jax
import jax.numpy as jnp
import numpy as np
from jax.experimental import pallas as pl
from jax.experimental.pallas import tpu as pltpu


def _block_kernel(x_ref, w12_ref, w2b_ref, wd_ref, wp_ref,
                  b12_ref, bd_ref, bp_ref, o_ref, stk_ref, *, H, W, C):
    f32 = jnp.float32
    bf16 = jnp.bfloat16
    WC = W * C
    B = x_ref.shape[0]            # images per grid step
    M = B * H                     # matmul M (rows of all images in the step)

    # ---- stage x: dy-stacked operand [x(y-1) | x(y) | x(y+1)] --------------
    # Lane group d (width W*C) holds rows shifted by (d-1).  x's zero padding
    # rows land on the image-boundary rows of groups 0 / 2 and stay there
    # untouched for the out1/out2 stagings (clipped dy taps -> no halo work).
    x_mid = []
    for b in range(B):
        xb = x_ref[b]                                     # (H+2, WC) f32
        x_mid.append(xb[1:H + 1, :])                      # residual rows
        for d in range(3):
            stk_ref[b * H:(b + 1) * H, d * WC:(d + 1) * WC] = xb[d:d + H, :]

    lhs_x = stk_ref[...].astype(bf16)                     # (M, 3*WC)

    # ---- conv1(x) and conv2a(x): one MXU push, N = 2*W*C lanes -------------
    r12 = (jnp.dot(lhs_x, w12_ref[...], preferred_element_type=f32)
           + b12_ref[...])
    out1 = jnp.maximum(r12[:, :WC], 0.0)                  # ReLU(conv1(x)+b1)
    out2 = r12[:, WC:]                                    # conv2a(x)+b2

    # ---- re-stage a (M, WC) value with clipped dy taps ---------------------
    def stage(v):
        stk_ref[:, WC:2 * WC] = v                                       # y
        for b in range(B):
            r0 = b * H
            stk_ref[r0 + 1:r0 + H, 0:WC] = v[r0:r0 + H - 1, :]          # y-1
            stk_ref[r0:r0 + H - 1, 2 * WC:3 * WC] = v[r0 + 1:r0 + H, :]  # y+1
        # Image-boundary rows of groups 0/2 keep the zeros written by the x
        # staging above.
        return stk_ref[...].astype(bf16)

    # ---- conv2(cat[x, out1]) = conv2a(x) + conv2b(out1) --------------------
    out2 = out2 + jnp.dot(stage(out1), w2b_ref[...],
                          preferred_element_type=f32)

    # ---- NA attention: depthwise 3x3 + ReLU, then 1x1 + Sigmoid ------------
    dw = jnp.maximum(
        jnp.dot(stage(out2), wd_ref[...], preferred_element_type=f32)
        + bd_ref[...], 0.0)
    att = jax.nn.sigmoid(
        jnp.dot(dw.astype(bf16), wp_ref[...], preferred_element_type=f32)
        + bp_ref[...])

    res = att * out2                                      # (M, WC) f32

    # ---- out = att*out2 + x; image pair packed along lanes (128-wide) ------
    for b in range(B):
        o_ref[0, :, b * WC:(b + 1) * WC] = res[b * H:(b + 1) * H, :] + x_mid[b]


def block_forward(x_nhwc, params, *, b_tile=2):
    """x_nhwc: (N, H, W, C) float32; params: HWIO conv weights + (1, C) biases."""
    N, H, W, C = x_nhwc.shape
    w1, b1, w2, b2, wd, bd, wp, bp = params
    WC = W * C

    # ------------------ wrapper-side weight packing (pure glue) -------------
    w1_np = np.asarray(w1, np.float32)
    w2_np = np.asarray(w2, np.float32)
    wd_np = np.asarray(wd, np.float32)
    wp_np = np.asarray(wp, np.float32)

    def banded(w_hwio):
        """(3,3,Ci,Co) HWIO -> (3, W*Ci, W*Co) banded; border dx taps clipped."""
        ci, co = w_hwio.shape[2], w_hwio.shape[3]
        out = np.zeros((3, W * ci, W * co), np.float32)
        for dy in range(3):
            for dx in range(3):
                for xw in range(W):
                    xin = xw + dx - 1
                    if 0 <= xin < W:
                        out[dy, xin * ci:(xin + 1) * ci,
                            xw * co:(xw + 1) * co] = w_hwio[dy, dx]
        return out

    w1_b = banded(w1_np)                            # conv1
    w2a_b = banded(w2_np[:, :, :C, :])              # conv2, x channels
    w2b_b = banded(w2_np[:, :, C:, :])              # conv2, out1 channels
    wd_full = np.einsum('hwc,ic->hwic', wd_np[:, :, 0, :],
                        np.eye(C, dtype=np.float32))
    wd_b = banded(wd_full)                          # depthwise as diag-banded

    # conv1 & conv2a fused along the output (lane) dim; dy stacked along K.
    w12 = np.concatenate([w1_b, w2a_b], axis=2).reshape(3 * WC, 2 * WC)
    w2b_k = w2b_b.reshape(3 * WC, WC)
    wd_k = wd_b.reshape(3 * WC, WC)
    wp_blk = np.kron(np.eye(W, dtype=np.float32), wp_np)   # 1x1 as block-diag

    # MXU operands in bf16 (halves weight DMA + VMEM); biases stay f32.
    w12, w2b_k, wd_k, wp_blk = (jnp.asarray(a, jnp.bfloat16)
                                for a in (w12, w2b_k, wd_k, wp_blk))

    def bias_row(b):
        return np.tile(np.asarray(b, np.float32).reshape(1, C), (1, W))

    b12_r = jnp.asarray(np.concatenate([bias_row(b1), bias_row(b2)], axis=1))
    bd_r = jnp.asarray(bias_row(bd))
    bp_r = jnp.asarray(bias_row(bp))

    # -------- pad batch to a multiple of b_tile; row-only halo on x ---------
    n_pad = (-N) % b_tile
    xin = x_nhwc
    if n_pad:
        xin = jnp.concatenate(
            [xin, jnp.zeros((n_pad, H, W, C), xin.dtype)], axis=0)
    Np = N + n_pad
    G = Np // b_tile
    x_pad = jnp.pad(xin, ((0, 0), (1, 1), (0, 0), (0, 0))).reshape(Np, H + 2, WC)

    kernel = functools.partial(_block_kernel, H=H, W=W, C=C)
    out_slab = pl.pallas_call(
        kernel,
        out_shape=jax.ShapeDtypeStruct((G, H, b_tile * WC), jnp.float32),
        grid_spec=pltpu.PrefetchScalarGridSpec(
            num_scalar_prefetch=0,
            grid=(G,),
            in_specs=[
                pl.BlockSpec((b_tile, H + 2, WC), lambda g: (g, 0, 0)),  # x pad
                pl.BlockSpec((3 * WC, 2 * WC), lambda g: (0, 0)),        # W1|W2a
                pl.BlockSpec((3 * WC, WC), lambda g: (0, 0)),            # W2b
                pl.BlockSpec((3 * WC, WC), lambda g: (0, 0)),            # Wdw
                pl.BlockSpec((WC, WC), lambda g: (0, 0)),                # Wpw
                pl.BlockSpec((1, 2 * WC), lambda g: (0, 0)),             # b1|b2
                pl.BlockSpec((1, WC), lambda g: (0, 0)),                 # bd
                pl.BlockSpec((1, WC), lambda g: (0, 0)),                 # bp
            ],
            out_specs=pl.BlockSpec((1, H, b_tile * WC), lambda g: (g, 0, 0)),
            scratch_shapes=[
                pltpu.VMEM((b_tile * H, 3 * WC), jnp.float32),  # dy staging
            ],
        ),
        compiler_params=pltpu.CompilerParams(
            dimension_semantics=("parallel",),
            vmem_limit_bytes=32 * 1024 * 1024),
    )(x_pad, w12, w2b_k, wd_k, wp_blk, b12_r, bd_r, bp_r)

    # Un-pack the lane-packed image groups back to NHWC (wrapper-side glue).
    out = out_slab.reshape(G, H, b_tile, W, C)
    out = jnp.transpose(out, (0, 2, 1, 3, 4)).reshape(Np, H, W, C)
    return out[:N]


# ------------------------------ pure-JAX reference ---------------------------
def _conv_nhwc(x, w, b, padding, groups=1):
    y = jax.lax.conv_general_dilated(
        x, w, window_strides=(1, 1), padding=padding,
        dimension_numbers=('NHWC', 'HWIO', 'NHWC'),
        feature_group_count=groups,
        precision=jax.lax.Precision.HIGHEST)
    return y + b.reshape(1, 1, 1, -1)


def block_ref(x, params):
    w1, b1, w2, b2, wd, bd, wp, bp = params
    C = x.shape[-1]
    pad1 = ((1, 1), (1, 1))
    out1 = jax.nn.relu(_conv_nhwc(x, w1, b1, pad1))
    dense = jnp.concatenate([x, out1], axis=-1)
    out2 = _conv_nhwc(dense, w2, b2, pad1)
    dw = jax.nn.relu(_conv_nhwc(out2, wd, bd, pad1, groups=C))
    att = jax.nn.sigmoid(
        _conv_nhwc(dw, wp.reshape(1, 1, C, C), bp, ((0, 0), (0, 0))))
    return att * out2 + x


if __name__ == "__main__":
    # PyTorch-style input shape (NCHW) for documentation; kernel runs NHWC.
    N, C, H, W = 2, 4, 16, 16
    key = jax.random.PRNGKey(0)
    keys = jax.random.split(key, 10)

    x_nchw = jax.random.normal(keys[0], (N, C, H, W), jnp.float32)
    x = jnp.transpose(x_nchw, (0, 2, 3, 1))  # NHWC

    s = 0.1
    params = (
        jax.random.normal(keys[1], (3, 3, C, C), jnp.float32) * s,      # conv1 w (HWIO)
        jax.random.normal(keys[2], (1, C), jnp.float32) * s,            # conv1 b
        jax.random.normal(keys[3], (3, 3, 2 * C, C), jnp.float32) * s,  # conv2 w
        jax.random.normal(keys[4], (1, C), jnp.float32) * s,            # conv2 b
        jax.random.normal(keys[5], (3, 3, 1, C), jnp.float32) * s,      # NA depthwise w
        jax.random.normal(keys[6], (1, C), jnp.float32) * s,            # NA depthwise b
        jax.random.normal(keys[7], (C, C), jnp.float32) * s,            # NA 1x1 w (in,out)
        jax.random.normal(keys[8], (1, C), jnp.float32) * s,            # NA 1x1 b
    )

    out = jax.block_until_ready(block_forward(x, params))
    ref = jax.block_until_ready(block_ref(x, params))
    # Weights (and matmul inputs) are bf16 on the MXU per the perf review, so
    # the tolerance is loosened accordingly vs. the HIGHEST-precision reference.
    np.testing.assert_allclose(np.asarray(out), np.asarray(ref),
                               rtol=2e-2, atol=2e-2)
    print("KERNEL_OK")
</pallas_src>

<mosaic_0001>
module attributes {stable_mosaic.version = 11 : i64} {
  func.func @_block_kernel(%arg0: i32, %arg1: memref<2x18x64xf32, #tpu.memory_space<vmem>>, %arg2: memref<192x128xbf16, #tpu.memory_space<vmem>>, %arg3: memref<192x64xbf16, #tpu.memory_space<vmem>>, %arg4: memref<192x64xbf16, #tpu.memory_space<vmem>>, %arg5: memref<64x64xbf16, #tpu.memory_space<vmem>>, %arg6: memref<1x128xf32, #tpu.memory_space<vmem>>, %arg7: memref<1x64xf32, #tpu.memory_space<vmem>>, %arg8: memref<1x64xf32, #tpu.memory_space<vmem>>, %arg9: memref<1x16x128xf32, #tpu.memory_space<vmem>>, %arg10: memref<32x192xf32, #tpu.memory_space<vmem>>) attributes {dimension_semantics = [#tpu.dimension_semantics<parallel>], iteration_bounds = array<i64: 1>, scalar_prefetch = 0 : i64, scratch_operands = 1 : i64, tpu.core_type = #tpu.core_type<tc>, window_params = [{transform_indices = @transform_0, window_bounds = array<i64: 2, 18, 64>}, {pipeline_mode = #tpu.pipeline_mode<synchronous>, transform_indices = @transform_1, window_bounds = array<i64: 192, 128>}, {pipeline_mode = #tpu.pipeline_mode<synchronous>, transform_indices = @transform_2, window_bounds = array<i64: 192, 64>}, {pipeline_mode = #tpu.pipeline_mode<synchronous>, transform_indices = @transform_3, window_bounds = array<i64: 192, 64>}, {pipeline_mode = #tpu.pipeline_mode<synchronous>, transform_indices = @transform_4, window_bounds = array<i64: 64, 64>}, {pipeline_mode = #tpu.pipeline_mode<synchronous>, transform_indices = @transform_5, window_bounds = array<i64: 1, 128>}, {pipeline_mode = #tpu.pipeline_mode<synchronous>, transform_indices = @transform_6, window_bounds = array<i64: 1, 64>}, {pipeline_mode = #tpu.pipeline_mode<synchronous>, transform_indices = @transform_7, window_bounds = array<i64: 1, 64>}, {transform_indices = @transform_8, window_bounds = array<i64: 1, 16, 128>}]} {
    %c0 = arith.constant 0 : index
    %c0_0 = arith.constant 0 : index
    %c0_1 = arith.constant 0 : index
    %0 = vector.load %arg1[%c0, %c0_0, %c0_1] : memref<2x18x64xf32, #tpu.memory_space<vmem>>, vector<1x18x64xf32>
    %1 = vector.shape_cast %0 : vector<1x18x64xf32> to vector<18x64xf32>
    %2 = vector.extract_strided_slice %1 {offsets = [1, 0], sizes = [16, 64], strides = [1, 1]} : vector<18x64xf32> to vector<16x64xf32>
    %3 = vector.extract_strided_slice %1 {offsets = [0, 0], sizes = [16, 64], strides = [1, 1]} : vector<18x64xf32> to vector<16x64xf32>
    %c0_2 = arith.constant 0 : index
    %c0_3 = arith.constant 0 : index
    %4 = vector.load %arg10[%c0_2, %c0_3] : memref<32x192xf32, #tpu.memory_space<vmem>>, vector<16x64xf32>
    tpu.vector_store %arg10[%c0_2, %c0_3], %3 {strides = array<i32>} : memref<32x192xf32, #tpu.memory_space<vmem>>, vector<16x64xf32>,
    %5 = vector.extract_strided_slice %1 {offsets = [1, 0], sizes = [16, 64], strides = [1, 1]} : vector<18x64xf32> to vector<16x64xf32>
    %c0_4 = arith.constant 0 : index
    %c64 = arith.constant 64 : index
    %6 = vector.load %arg10[%c0_4, %c64] : memref<32x192xf32, #tpu.memory_space<vmem>>, vector<16x64xf32>
    tpu.vector_store %arg10[%c0_4, %c64], %5 {strides = array<i32>} : memref<32x192xf32, #tpu.memory_space<vmem>>, vector<16x64xf32>,
    %7 = vector.extract_strided_slice %1 {offsets = [2, 0], sizes = [16, 64], strides = [1, 1]} : vector<18x64xf32> to vector<16x64xf32>
    %c0_5 = arith.constant 0 : index
    %c128 = arith.constant 128 : index
    %8 = vector.load %arg10[%c0_5, %c128] : memref<32x192xf32, #tpu.memory_space<vmem>>, vector<16x64xf32>
    tpu.vector_store %arg10[%c0_5, %c128], %7 {strides = array<i32>} : memref<32x192xf32, #tpu.memory_space<vmem>>, vector<16x64xf32>,
    %c1 = arith.constant 1 : index
    %c0_6 = arith.constant 0 : index
    %c0_7 = arith.constant 0 : index
    %9 = vector.load %arg1[%c1, %c0_6, %c0_7] : memref<2x18x64xf32, #tpu.memory_space<vmem>>, vector<1x18x64xf32>
    %10 = vector.shape_cast %9 : vector<1x18x64xf32> to vector<18x64xf32>
    %11 = vector.extract_strided_slice %10 {offsets = [1, 0], sizes = [16, 64], strides = [1, 1]} : vector<18x64xf32> to vector<16x64xf32>
    %12 = vector.extract_strided_slice %10 {offsets = [0, 0], sizes = [16, 64], strides = [1, 1]} : vector<18x64xf32> to vector<16x64xf32>
    %c16 = arith.constant 16 : index
    %c0_8 = arith.constant 0 : index
    %13 = vector.load %arg10[%c16, %c0_8] : memref<32x192xf32, #tpu.memory_space<vmem>>, vector<16x64xf32>
    tpu.vector_store %arg10[%c16, %c0_8], %12 {strides = array<i32>} : memref<32x192xf32, #tpu.memory_space<vmem>>, vector<16x64xf32>,
    %14 = vector.extract_strided_slice %10 {offsets = [1, 0], sizes = [16, 64], strides = [1, 1]} : vector<18x64xf32> to vector<16x64xf32>
    %c16_9 = arith.constant 16 : index
    %c64_10 = arith.constant 64 : index
    %15 = vector.load %arg10[%c16_9, %c64_10] : memref<32x192xf32, #tpu.memory_space<vmem>>, vector<16x64xf32>
    tpu.vector_store %arg10[%c16_9, %c64_10], %14 {strides = array<i32>} : memref<32x192xf32, #tpu.memory_space<vmem>>, vector<16x64xf32>,
    %16 = vector.extract_strided_slice %10 {offsets = [2, 0], sizes = [16, 64], strides = [1, 1]} : vector<18x64xf32> to vector<16x64xf32>
    %c16_11 = arith.constant 16 : index
    %c128_12 = arith.constant 128 : index
    %17 = vector.load %arg10[%c16_11, %c128_12] : memref<32x192xf32, #tpu.memory_space<vmem>>, vector<16x64xf32>
    tpu.vector_store %arg10[%c16_11, %c128_12], %16 {strides = array<i32>} : memref<32x192xf32, #tpu.memory_space<vmem>>, vector<16x64xf32>,
    %c0_13 = arith.constant 0 : index
    %c0_14 = arith.constant 0 : index
    %18 = vector.load %arg10[%c0_13, %c0_14] : memref<32x192xf32, #tpu.memory_space<vmem>>, vector<32x192xf32>
    %19 = arith.truncf %18 : vector<32x192xf32> to vector<32x192xbf16>
    %c0_15 = arith.constant 0 : index
    %c0_16 = arith.constant 0 : index
    %20 = vector.load %arg2[%c0_15, %c0_16] : memref<192x128xbf16, #tpu.memory_space<vmem>>, vector<192x128xbf16>
    %cst = arith.constant dense<0.000000e+00> : vector<32x128xf32>
    %21 = tpu.matmul %19, %20, %cst {dimension_numbers = #tpu.dot_dimension_numbers<[1], [0], [0], [1], [0, 0, 1, 1], [], []>} : vector<32x192xbf16>, vector<192x128xbf16>, vector<32x128xf32> -> vector<32x128xf32>
    %c0_17 = arith.constant 0 : index
    %c0_18 = arith.constant 0 : index
    %22 = vector.load %arg6[%c0_17, %c0_18] : memref<1x128xf32, #tpu.memory_space<vmem>>, vector<1x128xf32>
    %23 = vector.broadcast %22 : vector<1x128xf32> to vector<32x128xf32>
    %24 = arith.addf %21, %23 : vector<32x128xf32>
    %25 = vector.extract_strided_slice %24 {offsets = [0, 0], sizes = [32, 64], strides = [1, 1]} : vector<32x128xf32> to vector<32x64xf32>
    %cst_19 = arith.constant 0.000000e+00 : f32
    %26 = vector.broadcast %cst_19 : f32 to vector<32x64xf32>
    %27 = arith.maximumf %25, %26 : vector<32x64xf32>
    %28 = vector.extract_strided_slice %24 {offsets = [0, 64], sizes = [32, 64], strides = [1, 1]} : vector<32x128xf32> to vector<32x64xf32>
    %c0_20 = arith.constant 0 : index
    %c64_21 = arith.constant 64 : index
    %29 = vector.load %arg10[%c0_20, %c64_21] : memref<32x192xf32, #tpu.memory_space<vmem>>, vector<32x64xf32>
    tpu.vector_store %arg10[%c0_20, %c64_21], %27 {strides = array<i32>} : memref<32x192xf32, #tpu.memory_space<vmem>>, vector<32x64xf32>,
    %30 = vector.extract_strided_slice %27 {offsets = [0, 0], sizes = [15, 64], strides = [1, 1]} : vector<32x64xf32> to vector<15x64xf32>
    %c1_22 = arith.constant 1 : index
    %c0_23 = arith.constant 0 : index
    %31 = vector.load %arg10[%c1_22, %c0_23] : memref<32x192xf32, #tpu.memory_space<vmem>>, vector<15x64xf32>
    tpu.vector_store %arg10[%c1_22, %c0_23], %30 {strides = array<i32>} : memref<32x192xf32, #tpu.memory_space<vmem>>, vector<15x64xf32>,
    %32 = vector.extract_strided_slice %27 {offsets = [1, 0], sizes = [15, 64], strides = [1, 1]} : vector<32x64xf32> to vector<15x64xf32>
    %c0_24 = arith.constant 0 : index
    %c128_25 = arith.constant 128 : index
    %33 = vector.load %arg10[%c0_24, %c128_25] : memref<32x192xf32, #tpu.memory_space<vmem>>, vector<15x64xf32>
    tpu.vector_store %arg10[%c0_24, %c128_25], %32 {strides = array<i32>} : memref<32x192xf32, #tpu.memory_space<vmem>>, vector<15x64xf32>,
    %34 = vector.extract_strided_slice %27 {offsets = [16, 0], sizes = [15, 64], strides = [1, 1]} : vector<32x64xf32> to vector<15x64xf32>
    %c17 = arith.constant 17 : index
    %c0_26 = arith.constant 0 : index
    %35 = vector.load %arg10[%c17, %c0_26] : memref<32x192xf32, #tpu.memory_space<vmem>>, vector<15x64xf32>
    tpu.vector_store %arg10[%c17, %c0_26], %34 {strides = array<i32>} : memref<32x192xf32, #tpu.memory_space<vmem>>, vector<15x64xf32>,
    %36 = vector.extract_strided_slice %27 {offsets = [17, 0], sizes = [15, 64], strides = [1, 1]} : vector<32x64xf32> to vector<15x64xf32>
    %c16_27 = arith.constant 16 : index
    %c128_28 = arith.constant 128 : index
    %37 = vector.load %arg10[%c16_27, %c128_28] : memref<32x192xf32, #tpu.memory_space<vmem>>, vector<15x64xf32>
    tpu.vector_store %arg10[%c16_27, %c128_28], %36 {strides = array<i32>} : memref<32x192xf32, #tpu.memory_space<vmem>>, vector<15x64xf32>,
    %c0_29 = arith.constant 0 : index
    %c0_30 = arith.constant 0 : index
    %38 = vector.load %arg10[%c0_29, %c0_30] : memref<32x192xf32, #tpu.memory_space<vmem>>, vector<32x192xf32>
    %39 = arith.truncf %38 : vector<32x192xf32> to vector<32x192xbf16>
    %c0_31 = arith.constant 0 : index
    %c0_32 = arith.constant 0 : index
    %40 = vector.load %arg3[%c0_31, %c0_32] : memref<192x64xbf16, #tpu.memory_space<vmem>>, vector<192x64xbf16>
    %cst_33 = arith.constant dense<0.000000e+00> : vector<32x64xf32>
    %41 = tpu.matmul %39, %40, %cst_33 {dimension_numbers = #tpu.dot_dimension_numbers<[1], [0], [0], [1], [0, 0, 1, 1], [], []>} : vector<32x192xbf16>, vector<192x64xbf16>, vector<32x64xf32> -> vector<32x64xf32>
    %42 = arith.addf %28, %41 : vector<32x64xf32>
    %c0_34 = arith.constant 0 : index
    %c64_35 = arith.constant 64 : index
    %43 = vector.load %arg10[%c0_34, %c64_35] : memref<32x192xf32, #tpu.memory_space<vmem>>, vector<32x64xf32>
    tpu.vector_store %arg10[%c0_34, %c64_35], %42 {strides = array<i32>} : memref<32x192xf32, #tpu.memory_space<vmem>>, vector<32x64xf32>,
    %44 = vector.extract_strided_slice %42 {offsets = [0, 0], sizes = [15, 64], strides = [1, 1]} : vector<32x64xf32> to vector<15x64xf32>
    %c1_36 = arith.constant 1 : index
    %c0_37 = arith.constant 0 : index
    %45 = vector.load %arg10[%c1_36, %c0_37] : memref<32x192xf32, #tpu.memory_space<vmem>>, vector<15x64xf32>
    tpu.vector_store %arg10[%c1_36, %c0_37], %44 {strides = array<i32>} : memref<32x192xf32, #tpu.memory_space<vmem>>, vector<15x64xf32>,
    %46 = vector.extract_strided_slice %42 {offsets = [1, 0], sizes = [15, 64], strides = [1, 1]} : vector<32x64xf32> to vector<15x64xf32>
    %c0_38 = arith.constant 0 : index
    %c128_39 = arith.constant 128 : index
    %47 = vector.load %arg10[%c0_38, %c128_39] : memref<32x192xf32, #tpu.memory_space<vmem>>, vector<15x64xf32>
    tpu.vector_store %arg10[%c0_38, %c128_39], %46 {strides = array<i32>} : memref<32x192xf32, #tpu.memory_space<vmem>>, vector<15x64xf32>,
    %48 = vector.extract_strided_slice %42 {offsets = [16, 0], sizes = [15, 64], strides = [1, 1]} : vector<32x64xf32> to vector<15x64xf32>
    %c17_40 = arith.constant 17 : index
    %c0_41 = arith.constant 0 : index
    %49 = vector.load %arg10[%c17_40, %c0_41] : memref<32x192xf32, #tpu.memory_space<vmem>>, vector<15x64xf32>
    tpu.vector_store %arg10[%c17_40, %c0_41], %48 {strides = array<i32>} : memref<32x192xf32, #tpu.memory_space<vmem>>, vector<15x64xf32>,
    %50 = vector.extract_strided_slice %42 {offsets = [17, 0], sizes = [15, 64], strides = [1, 1]} : vector<32x64xf32> to vector<15x64xf32>
    %c16_42 = arith.constant 16 : index
    %c128_43 = arith.constant 128 : index
    %51 = vector.load %arg10[%c16_42, %c128_43] : memref<32x192xf32, #tpu.memory_space<vmem>>, vector<15x64xf32>
    tpu.vector_store %arg10[%c16_42, %c128_43], %50 {strides = array<i32>} : memref<32x192xf32, #tpu.memory_space<vmem>>, vector<15x64xf32>,
    %c0_44 = arith.constant 0 : index
    %c0_45 = arith.constant 0 : index
    %52 = vector.load %arg10[%c0_44, %c0_45] : memref<32x192xf32, #tpu.memory_space<vmem>>, vector<32x192xf32>
    %53 = arith.truncf %52 : vector<32x192xf32> to vector<32x192xbf16>
    %c0_46 = arith.constant 0 : index
    %c0_47 = arith.constant 0 : index
    %54 = vector.load %arg4[%c0_46, %c0_47] : memref<192x64xbf16, #tpu.memory_space<vmem>>, vector<192x64xbf16>
    %cst_48 = arith.constant dense<0.000000e+00> : vector<32x64xf32>
    %55 = tpu.matmul %53, %54, %cst_48 {dimension_numbers = #tpu.dot_dimension_numbers<[1], [0], [0], [1], [0, 0, 1, 1], [], []>} : vector<32x192xbf16>, vector<192x64xbf16>, vector<32x64xf32> -> vector<32x64xf32>
    %c0_49 = arith.constant 0 : index
    %c0_50 = arith.constant 0 : index
    %56 = vector.load %arg7[%c0_49, %c0_50] : memref<1x64xf32, #tpu.memory_space<vmem>>, vector<1x64xf32>
    %57 = vector.broadcast %56 : vector<1x64xf32> to vector<32x64xf32>
    %58 = arith.addf %55, %57 : vector<32x64xf32>
    %cst_51 = arith.constant 0.000000e+00 : f32
    %59 = vector.broadcast %cst_51 : f32 to vector<32x64xf32>
    %60 = arith.maximumf %58, %59 : vector<32x64xf32>
    %61 = arith.truncf %60 : vector<32x64xf32> to vector<32x64xbf16>
    %c0_52 = arith.constant 0 : index
    %c0_53 = arith.constant 0 : index
    %62 = vector.load %arg5[%c0_52, %c0_53] : memref<64x64xbf16, #tpu.memory_space<vmem>>, vector<64x64xbf16>
    %cst_54 = arith.constant dense<0.000000e+00> : vector<32x64xf32>
    %63 = tpu.matmul %61, %62, %cst_54 {dimension_numbers = #tpu.dot_dimension_numbers<[1], [0], [0], [1], [0, 0, 1, 1], [], []>} : vector<32x64xbf16>, vector<64x64xbf16>, vector<32x64xf32> -> vector<32x64xf32>
    %c0_55 = arith.constant 0 : index
    %c0_56 = arith.constant 0 : index
    %64 = vector.load %arg8[%c0_55, %c0_56] : memref<1x64xf32, #tpu.memory_space<vmem>>, vector<1x64xf32>
    %65 = vector.broadcast %64 : vector<1x64xf32> to vector<32x64xf32>
    %66 = arith.addf %63, %65 : vector<32x64xf32>
    %67 = arith.negf %66 : vector<32x64xf32>
    %68 = math.exp %67 : vector<32x64xf32>
    %cst_57 = arith.constant 1.000000e+00 : f32
    %69 = vector.broadcast %cst_57 : f32 to vector<32x64xf32>
    %70 = arith.addf %69, %68 : vector<32x64xf32>
    %71 = arith.divf %69, %70 : vector<32x64xf32>
    %72 = arith.mulf %71, %42 : vector<32x64xf32>
    %73 = vector.extract_strided_slice %72 {offsets = [0, 0], sizes = [16, 64], strides = [1, 1]} : vector<32x64xf32> to vector<16x64xf32>
    %74 = arith.addf %73, %2 : vector<16x64xf32>
    %c0_58 = arith.constant 0 : index
    %c0_59 = arith.constant 0 : index
    %c0_60 = arith.constant 0 : index
    %75 = vector.load %arg9[%c0_58, %c0_59, %c0_60] : memref<1x16x128xf32, #tpu.memory_space<vmem>>, vector<1x16x64xf32>
    %76 = vector.shape_cast %75 : vector<1x16x64xf32> to vector<16x64xf32>
    %77 = vector.shape_cast %74 : vector<16x64xf32> to vector<1x16x64xf32>
    tpu.vector_store %arg9[%c0_58, %c0_59, %c0_60], %77 {strides = array<i32>} : memref<1x16x128xf32, #tpu.memory_space<vmem>>, vector<1x16x64xf32>,
    %78 = vector.extract_strided_slice %72 {offsets = [16, 0], sizes = [16, 64], strides = [1, 1]} : vector<32x64xf32> to vector<16x64xf32>
    %79 = arith.addf %78, %11 : vector<16x64xf32>
    %c0_61 = arith.constant 0 : index
    %c0_62 = arith.constant 0 : index
    %c64_63 = arith.constant 64 : index
    %80 = vector.load %arg9[%c0_61, %c0_62, %c64_63] : memref<1x16x128xf32, #tpu.memory_space<vmem>>, vector<1x16x64xf32>
    %81 = vector.shape_cast %80 : vector<1x16x64xf32> to vector<16x64xf32>
    %82 = vector.shape_cast %79 : vector<16x64xf32> to vector<1x16x64xf32>
    tpu.vector_store %arg9[%c0_61, %c0_62, %c64_63], %82 {strides = array<i32>} : memref<1x16x128xf32, #tpu.memory_space<vmem>>, vector<1x16x64xf32>,
    return
  }
  func.func @transform_0(%arg0: i32) -> (i32, i32, i32) {
    %c0_i32 = arith.constant 0 : i32
    %c0_i32_0 = arith.constant 0 : i32
    %c0_i32_1 = arith.constant 0 : i32
    return %arg0, %c0_i32, %c0_i32_0 : i32, i32, i32
  }
  func.func @transform_1(%arg0: i32) -> (i32, i32) {
    %c0_i32 = arith.constant 0 : i32
    %c0_i32_0 = arith.constant 0 : i32
    %c0_i32_1 = arith.constant 0 : i32
    return %c0_i32, %c0_i32_0 : i32, i32
  }
  func.func @transform_2(%arg0: i32) -> (i32, i32) {
    %c0_i32 = arith.constant 0 : i32
    %c0_i32_0 = arith.constant 0 : i32
    %c0_i32_1 = arith.constant 0 : i32
    return %c0_i32, %c0_i32_0 : i32, i32
  }
  func.func @transform_3(%arg0: i32) -> (i32, i32) {
    %c0_i32 = arith.constant 0 : i32
    %c0_i32_0 = arith.constant 0 : i32
    %c0_i32_1 = arith.constant 0 : i32
    return %c0_i32, %c0_i32_0 : i32, i32
  }
  func.func @transform_4(%arg0: i32) -> (i32, i32) {
    %c0_i32 = arith.constant 0 : i32
    %c0_i32_0 = arith.constant 0 : i32
    %c0_i32_1 = arith.constant 0 : i32
    return %c0_i32, %c0_i32_0 : i32, i32
  }
  func.func @transform_5(%arg0: i32) -> (i32, i32) {
    %c0_i32 = arith.constant 0 : i32
    %c0_i32_0 = arith.constant 0 : i32
    %c0_i32_1 = arith.constant 0 : i32
    return %c0_i32, %c0_i32_0 : i32, i32
  }
  func.func @transform_6(%arg0: i32) -> (i32, i32) {
    %c0_i32 = arith.constant 0 : i32
    %c0_i32_0 = arith.constant 0 : i32
    %c0_i32_1 = arith.constant 0 : i32
    return %c0_i32, %c0_i32_0 : i32, i32
  }
  func.func @transform_7(%arg0: i32) -> (i32, i32) {
    %c0_i32 = arith.constant 0 : i32
    %c0_i32_0 = arith.constant 0 : i32
    %c0_i32_1 = arith.constant 0 : i32
    return %c0_i32, %c0_i32_0 : i32, i32
  }
  func.func @transform_8(%arg0: i32) -> (i32, i32, i32) {
    %c0_i32 = arith.constant 0 : i32
    %c0_i32_0 = arith.constant 0 : i32
    %c0_i32_1 = arith.constant 0 : i32
    return %arg0, %c0_i32, %c0_i32_0 : i32, i32, i32
  }
}

</mosaic_0001>

<llo_original>
// kernel: tpu_custom_call.1
$region0: #{tpu_custom_call.1}
  #allocation0 [shape = 'u32[]', space=smem, size = 0x4, offset = 0x4, fixed_abs, tag = 'smem constant byte address 0x4 - core index']
  #allocation1 [shape = 'u32[144,128]{1,0:T(1,128)}', space=vmem, size = 0x12000, scoped, tag = 'internal scratch']
  #allocation2 [shape = 'f32[32,192]{1,0:T(8,128)}', space=vmem, size = 0x8000, scoped, tag = 'scratch operand']
  %s0 = inlined_call_operand.vmem [shape: f32[2,18,64], index: 0, kind: input, shape index: {}]
  %s1 = inlined_call_operand.vmem [shape: bf16[192,128], index: 1, kind: input, shape index: {}]
  %s2 = inlined_call_operand.vmem [shape: bf16[192,64], index: 2, kind: input, shape index: {}]
  %s3 = inlined_call_operand.vmem [shape: bf16[192,64], index: 3, kind: input, shape index: {}]
  %s4 = inlined_call_operand.vmem [shape: bf16[64,64], index: 4, kind: input, shape index: {}]
  %s5 = inlined_call_operand.vmem [shape: f32[1,128], index: 5, kind: input, shape index: {}]
  %s6 = inlined_call_operand.vmem [shape: f32[1,64], index: 6, kind: input, shape index: {}]
  %s7 = inlined_call_operand.vmem [shape: f32[1,64], index: 7, kind: input, shape index: {}]
  %s8 = inlined_call_operand.hbm [shape: f32[1,16,128], index: 8, kind: output, shape index: {}]
  %s9 = sld [smem:[#allocation0]]
  $region42: #{tpu_custom_call.1} parent=0
    _
  %s11 = ssub.s32 1, %s9
  %s12 = scalar_select 0, %s11, %s9
  $region1: #{tpu_custom_call.1} parent=0
    #allocation3 [shape = 'u8[8192]{0}', space=vmem, size = 0x2000, scoped, tag = 'output window, operand 0, single buffered']
    #allocation4 [shape = 's32[1]{0}', space=sflag, size = 0x4, scoped, tag = 'scoped memory for tpu_custom_call.1']
    %13 = vsyncpa [#allocation4], 0
    // Predicated region
    $region2: #{tpu_custom_call.1} parent=1 // pred_check
      _
    $region3: #{tpu_custom_call.1} parent=1 // pred_check_branch
      %15 = sbr.rel (0) target = $region5
    $region4: #{tpu_custom_call.1} parent=1 // pred_region
      _
    $region5: #{tpu_custom_call.1} parent=1 // pred_fallthru
      _
    // Predicated region
    $region6: #{tpu_custom_call.1} parent=1 // pred_check
      _
    $region7: #{tpu_custom_call.1} parent=1 // pred_check_branch
      %17 = sbr.rel (0) target = $region9
    $region8: #{tpu_custom_call.1} parent=1 // pred_region
      _
    $region9: #{tpu_custom_call.1} parent=1 // pred_fallthru
      _
    // Predicated region
    $region10: #{tpu_custom_call.1} parent=1 // pred_check
      _
    $region11: #{tpu_custom_call.1} parent=1 // pred_check_branch
      %19 = sbr.rel (0) target = $region13
    $region12: #{tpu_custom_call.1} parent=1 // pred_region
      _
    $region13: #{tpu_custom_call.1} parent=1 // pred_fallthru
      _
    // Predicated region
    $region14: #{tpu_custom_call.1} parent=1 // pred_check
      _
    $region15: #{tpu_custom_call.1} parent=1 // pred_check_branch
      %21 = sbr.rel (0) target = $region17
    $region16: #{tpu_custom_call.1} parent=1 // pred_region
      _
    $region17: #{tpu_custom_call.1} parent=1 // pred_fallthru
      _
    // Predicated region
    $region18: #{tpu_custom_call.1} parent=1 // pred_check
      _
    $region19: #{tpu_custom_call.1} parent=1 // pred_check_branch
      %23 = sbr.rel (0) target = $region21
    $region20: #{tpu_custom_call.1} parent=1 // pred_region
      _
    $region21: #{tpu_custom_call.1} parent=1 // pred_fallthru
      _
    // Predicated region
    $region22: #{tpu_custom_call.1} parent=1 // pred_check
      _
    $region23: #{tpu_custom_call.1} parent=1 // pred_check_branch
      %25 = sbr.rel (0) target = $region25
    $region24: #{tpu_custom_call.1} parent=1 // pred_region
      _
    $region25: #{tpu_custom_call.1} parent=1 // pred_fallthru
      _
    // Predicated region
    $region26: #{tpu_custom_call.1} parent=1 // pred_check
      _
    $region27: #{tpu_custom_call.1} parent=1 // pred_check_branch
      %27 = sbr.rel (0) target = $region29
    $region28: #{tpu_custom_call.1} parent=1 // pred_region
      _
    $region29: #{tpu_custom_call.1} parent=1 // pred_fallthru
      _
    // Predicated region
    $region30: #{tpu_custom_call.1} parent=1 // pred_check
      _
    $region31: #{tpu_custom_call.1} parent=1 // pred_check_branch
      %29 = sbr.rel (0) target = $region33
    $region32: #{tpu_custom_call.1} parent=1 // pred_region
      _
    $region33: #{tpu_custom_call.1} parent=1 // pred_fallthru
      _
    %v31 = vld [vmem:[%s0] sm:$0xff]
    %v32 = vld [vmem:[%s0 + $0x8] sm:$0xff]
    %v33 = vld [vmem:[%s0 + $0x10] sm:$0x3]
    %vm34 = vcmask 523264
    %35 = vst.msk [vmem:[#allocation2] sm:$0xff] %vm34, %v31
    %36 = vst.msk [vmem:[#allocation2 + $0x10] sm:$0xff] %vm34, %v32
    %vm40 = vcmask 1046528
    %v41 = vrot.slane %v31, 1
    %v42 = vrot.slane %v32, 1
    %v43 = vsel %vm40, %v41, %v42
    %v44 = vrot.slane %v33, 1
    %v45 = vsel %vm40, %v42, %v44
    %46 = vrot.lane.b32.xlu0 %v43, 64
    %v47 = vpop.permute.xlu0 %46
    %48 = vrot.lane.b32.xlu0 %v45, 64
    %v49 = vpop.permute.xlu0 %48
    %vm52 = vcmask 1048064
    %53 = vst.msk [vmem:[#allocation2] sm:$0xff] %vm52, %v47
    %54 = vst.msk [vmem:[#allocation2 + $0x10] sm:$0xff] %vm52, %v49
    %vm55 = vcmask 1045504
    %v56 = vrot.slane %v31, 2
    %v57 = vrot.slane %v32, 2
    %v58 = vsel %vm55, %v56, %v57
    %v59 = vrot.slane %v33, 2
    %v60 = vsel %vm55, %v57, %v59
    %63 = vst.msk [vmem:[#allocation2 + $0x8] sm:$0xff] %vm34, %v58
    %64 = vst.msk [vmem:[#allocation2 + $0x18] sm:$0xff] %vm34, %v60
    %s65 = scalar_lea.vmem %s0, 24
    %v66 = vld [vmem:[%s65] sm:$0xff]
    %v67 = vld [vmem:[%s65 + $0x8] sm:$0xff]
    %v68 = vld [vmem:[%s65 + $0x10] sm:$0x3]
    %69 = vst.msk [vmem:[#allocation2 + $0x20] sm:$0xff] %vm34, %v66
    %70 = vst.msk [vmem:[#allocation2 + $0x30] sm:$0xff] %vm34, %v67
    %v74 = vrot.slane %v66, 1
    %v75 = vrot.slane %v67, 1
    %v76 = vsel %vm40, %v74, %v75
    %v77 = vrot.slane %v68, 1
    %v78 = vsel %vm40, %v75, %v77
    %79 = vrot.lane.b32.xlu0 %v76, 64
    %v80 = vpop.permute.xlu0 %79
    %81 = vrot.lane.b32.xlu0 %v78, 64
    %v82 = vpop.permute.xlu0 %81
    %85 = vst.msk [vmem:[#allocation2 + $0x20] sm:$0xff] %vm52, %v80
    %86 = vst.msk [vmem:[#allocation2 + $0x30] sm:$0xff] %vm52, %v82
    %v87 = vrot.slane %v66, 2
    %v88 = vrot.slane %v67, 2
    %v89 = vsel %vm55, %v87, %v88
    %v90 = vrot.slane %v68, 2
    %v91 = vsel %vm55, %v88, %v90
    %94 = vst.msk [vmem:[#allocation2 + $0x28] sm:$0xff] %vm34, %v89
    %95 = vst.msk [vmem:[#allocation2 + $0x38] sm:$0xff] %vm34, %v91
    %v96 = vld [vmem:[#allocation2] sm:$0xff]
    %v97 = vld [vmem:[#allocation2 + $0x8] sm:$0xff]
    %v98 = vld [vmem:[#allocation2 + $0x10] sm:$0xff]
    %v99 = vld [vmem:[#allocation2 + $0x18] sm:$0xff]
    %v100 = vld [vmem:[#allocation2 + $0x20] sm:$0xff]
    %v101 = vld [vmem:[#allocation2 + $0x28] sm:$0xff]
    %v102 = vld [vmem:[#allocation2 + $0x30] sm:$0xff]
    %v103 = vld [vmem:[#allocation2 + $0x38] sm:$0xff]
    %v104 = vpack.c.bf16 %v98, %v96
    %v105 = vpack.c.bf16 %v99, %v97
    %v106 = vpack.c.bf16 %v102, %v100
    %v107 = vpack.c.bf16 %v103, %v101
    %v108 = vld [vmem:[%s1] sm:$0xf]
    %v109 = vld [vmem:[%s1 + $0x4] sm:$0xf]
    %v110 = vld [vmem:[%s1 + $0x8] sm:$0xf]
    %v111 = vld [vmem:[%s1 + $0xc] sm:$0xf]
    %v112 = vld [vmem:[%s1 + $0x10] sm:$0xf]
    %v113 = vld [vmem:[%s1 + $0x14] sm:$0xf]
    %v114 = vld [vmem:[%s1 + $0x18] sm:$0xf]
    %v115 = vld [vmem:[%s1 + $0x1c] sm:$0xf]
    %v116 = vld [vmem:[%s1 + $0x20] sm:$0xf]
    %v117 = vld [vmem:[%s1 + $0x24] sm:$0xf]
    %v118 = vld [vmem:[%s1 + $0x28] sm:$0xf]
    %v119 = vld [vmem:[%s1 + $0x2c] sm:$0xf]
    %v120 = vld [vmem:[%s1 + $0x30] sm:$0xf]
    %v121 = vld [vmem:[%s1 + $0x34] sm:$0xf]
    %v122 = vld [vmem:[%s1 + $0x38] sm:$0xf]
    %v123 = vld [vmem:[%s1 + $0x3c] sm:$0xf]
    %v124 = vld [vmem:[%s1 + $0x40] sm:$0xf]
    %v125 = vld [vmem:[%s1 + $0x44] sm:$0xf]
    %v126 = vld [vmem:[%s1 + $0x48] sm:$0xf]
    %v127 = vld [vmem:[%s1 + $0x4c] sm:$0xf]
    %v128 = vld [vmem:[%s1 + $0x50] sm:$0xf]
    %v129 = vld [vmem:[%s1 + $0x54] sm:$0xf]
    %v130 = vld [vmem:[%s1 + $0x58] sm:$0xf]
    %v131 = vld [vmem:[%s1 + $0x5c] sm:$0xf]
    %v132 = vld [vmem:[%s5] sm:$0x1]
    %v134 = vlaneseq
    %v135 = vshrl.u32 %v134, 7
    %v136 = vsub.s32 0, %v135
    %v137 = vrot.slane %v132, %v136
    %v163 = vunpack.c.l.b16 %v108
    %v164 = vunpack.c.l.b16 %v109
    %v165 = vunpack.c.l.b16 %v110
    %v166 = vunpack.c.l.b16 %v111
    %v167 = vunpack.c.l.b16 %v112
    %v168 = vunpack.c.l.b16 %v113
    %v169 = vunpack.c.l.b16 %v114
    %v170 = vunpack.c.l.b16 %v115
    %v171 = vunpack.c.l.b16 %v116
    %v172 = vunpack.c.l.b16 %v117
    %v173 = vunpack.c.l.b16 %v118
    %v174 = vunpack.c.l.b16 %v119
    %v175 = vunpack.c.l.b16 %v120
    %v176 = vunpack.c.l.b16 %v121
    %v177 = vunpack.c.l.b16 %v122
    %v178 = vunpack.c.l.b16 %v123
    %v179 = vunpack.c.l.b16 %v124
    %v180 = vunpack.c.l.b16 %v125
    %v181 = vunpack.c.l.b16 %v126
    %v182 = vunpack.c.l.b16 %v127
    %v183 = vunpack.c.l.b16 %v128
    %v184 = vunpack.c.l.b16 %v129
    %v185 = vunpack.c.l.b16 %v130
    %v186 = vunpack.c.l.b16 %v131
    %v187 = vpack.c.b16 %v164, %v163
    %v188 = vpack.c.b16 %v166, %v165
    %v189 = vpack.c.b16 %v168, %v167
    %v190 = vpack.c.b16 %v170, %v169
    %v191 = vpack.c.b16 %v172, %v171
    %v192 = vpack.c.b16 %v174, %v173
    %v193 = vpack.c.b16 %v176, %v175
    %v194 = vpack.c.b16 %v178, %v177
    %v195 = vpack.c.b16 %v180, %v179
    %v196 = vpack.c.b16 %v182, %v181
    %v197 = vpack.c.b16 %v184, %v183
    %v198 = vpack.c.b16 %v186, %v185
    %v212 = vsel %vm34, %v105, 0
    %v215 = vsel %vm34, %v107, 0
    %217 = vmatprep.subr.bf16.mxu0 0
    %218 = vmatpush1.bf16.msra.mxu0 %v194
    %219 = vmatprep.subr.bf16.mxu0 0
    %220 = vmatpush1.bf16.msra.mxu0 %v193
    %221 = vmatprep.subr.bf16.mxu0 0
    %222 = vmatpush1.bf16.msra.mxu0 %v192
    %223 = vmatprep.subr.bf16.mxu0 0
    %224 = vmatpush1.bf16.msra.mxu0 %v191
    %225 = vmatprep.subr.bf16.mxu0 0
    %226 = vmatpush1.bf16.msra.mxu0 %v190
    %227 = vmatprep.subr.bf16.mxu0 0
    %228 = vmatpush1.bf16.msra.mxu0 %v189
    %229 = vmatprep.subr.bf16.mxu0 0
    %230 = vmatpush1.bf16.msra.mxu0 %v188
    %231 = vmatprep.subr.bf16.mxu0 0
    %232 = vmatpush1.bf16.msra.mxu0 %v187
    %233 = vmatprep.subr.bf16.mxu0 0
    %234 = vmatpush2.bf16.msra.mxu0 0
    %235 = vmatprep.subr.bf16.mxu0 0
    %236 = vmatpush2.bf16.msra.mxu0 0
    %237 = vmatprep.subr.bf16.mxu0 0
    %238 = vmatpush2.bf16.msra.mxu0 0
    %239 = vmatprep.subr.bf16.mxu0 0
    %240 = vmatpush2.bf16.msra.mxu0 0
    %241 = vmatprep.subr.bf16.mxu0 0
    %242 = vmatpush2.bf16.msra.mxu0 %v198
    %243 = vmatprep.subr.bf16.mxu0 0
    %244 = vmatpush2.bf16.msra.mxu0 %v197
    %245 = vmatprep.subr.bf16.mxu0 0
    %246 = vmatpush2.bf16.msra.mxu0 %v196
    %247 = vmatprep.subr.bf16.mxu0 0
    %248 = vmatpush2.bf16.msra.mxu0 %v195
    %249 = vmatprep.mubr.bf16.mxu0 %v212
    %250 = vmatmul.mubr.bf16.gmra.mxu0 %v104
    %v251 = vpop.f32.mrf.mxu0
    %v252 = vadd.f32 %v137, %v251
    %v253 = vpop.f32.mrf.mxu0
    %v254 = vpop.f32.mrf.mxu0
    %v255 = vadd.f32 %v137, %v254
    %v256 = vpop.f32.mrf.mxu0
    %257 = vmatprep.mubr.bf16.mxu0 %v215
    %258 = vmatmul.mubr.bf16.gmra.mxu0 %v106
    %v259 = vpop.f32.mrf.mxu0
    %v260 = vadd.f32 %v137, %v259
    %v261 = vpop.f32.mrf.mxu0
    %v262 = vpop.f32.mrf.mxu0
    %v263 = vadd.f32 %v137, %v262
    %v264 = vpop.f32.mrf.mxu0
    %265 = vdwg.mxu0
    %v266 = vmax.f32 %v252, 0.0
    %v267 = vmax.f32 %v255, 0.0
    %v268 = vmax.f32 %v260, 0.0
    %v269 = vmax.f32 %v263, 0.0
    %274 = vrot.lane.b32.xlu0 %v266, 64
    %v275 = vpop.permute.xlu0 %274
    %276 = vrot.lane.b32.xlu0 %v267, 64
    %v277 = vpop.permute.xlu0 %276
    %278 = vrot.lane.b32.xlu0 %v268, 64
    %v279 = vpop.permute.xlu0 %278
    %280 = vrot.lane.b32.xlu0 %v269, 64
    %v281 = vpop.permute.xlu0 %280
    %286 = vst.msk [vmem:[#allocation2] sm:$0xff] %vm52, %v275
    %287 = vst.msk [vmem:[#allocation2 + $0x10] sm:$0xff] %vm52, %v277
    %288 = vst.msk [vmem:[#allocation2 + $0x20] sm:$0xff] %vm52, %v279
    %289 = vst.msk [vmem:[#allocation2 + $0x30] sm:$0xff] %vm52, %v281
    %vm290 = vcmask 1040384
    %v291 = vrot.slane %v266, 7
    %v292 = vrot.slane %v267, 7
    %v293 = vsel %vm290, %v291, %v292
    %vm296 = vcmask 523265
    %297 = vst.msk [vmem:[#allocation2] sm:$0xfe] %vm296, %v291
    %298 = vst.msk [vmem:[#allocation2 + $0x10] sm:$0xff] %vm34, %v293
    %v299 = vrot.slane %v266, 1
    %v300 = vrot.slane %v267, 1
    %v301 = vsel %vm40, %v299, %v300
    %304 = vst.msk [vmem:[#allocation2 + $0x8] sm:$0xff] %vm34, %v301
    %vm305 = vcmask 522240
    %306 = vst.msk [vmem:[#allocation2 + $0x18] sm:$0x7f] %vm305, %v300
    %v307 = vrot.slane %v268, 7
    %v308 = vrot.slane %v269, 7
    %v309 = vsel %vm290, %v307, %v308
    %312 = vst.msk [vmem:[#allocation2 + $0x20] sm:$0xfe] %vm296, %v307
    %313 = vst.msk [vmem:[#allocation2 + $0x30] sm:$0xff] %vm34, %v309
    %v314 = vrot.slane %v268, 1
    %v315 = vrot.slane %v269, 1
    %v316 = vsel %vm40, %v314, %v315
    %319 = vst.msk [vmem:[#allocation2 + $0x28] sm:$0xff] %vm34, %v316
    %320 = vst.msk [vmem:[#allocation2 + $0x38] sm:$0x7f] %vm305, %v315
    %v321 = vld [vmem:[#allocation2] sm:$0xff]
    %v322 = vld [vmem:[#allocation2 + $0x8] sm:$0xff]
    %v323 = vld [vmem:[#allocation2 + $0x10] sm:$0xff]
    %v324 = vld [vmem:[#allocation2 + $0x18] sm:$0xff]
    %v325 = vld [vmem:[#allocation2 + $0x20] sm:$0xff]
    %v326 = vld [vmem:[#allocation2 + $0x28] sm:$0xff]
    %v327 = vld [vmem:[#allocation2 + $0x30] sm:$0xff]
    %v328 = vld [vmem:[#allocation2 + $0x38] sm:$0xff]
    %v329 = vpack.c.bf16 %v323, %v321
    %v330 = vpack.c.bf16 %v324, %v322
    %v331 = vpack.c.bf16 %v327, %v325
    %v332 = vpack.c.bf16 %v328, %v326
    %v333 = vld [vmem:[%s2] sm:$0xf]
    %v334 = vld [vmem:[%s2 + $0x4] sm:$0xf]
    %v335 = vld [vmem:[%s2 + $0x8] sm:$0xf]
    %v336 = vld [vmem:[%s2 + $0xc] sm:$0xf]
    %v337 = vld [vmem:[%s2 + $0x10] sm:$0xf]
    %v338 = vld [vmem:[%s2 + $0x14] sm:$0xf]
    %v339 = vld [vmem:[%s2 + $0x18] sm:$0xf]
    %v340 = vld [vmem:[%s2 + $0x1c] sm:$0xf]
    %v341 = vld [vmem:[%s2 + $0x20] sm:$0xf]
    %v342 = vld [vmem:[%s2 + $0x24] sm:$0xf]
    %v343 = vld [vmem:[%s2 + $0x28] sm:$0xf]
    %v344 = vld [vmem:[%s2 + $0x2c] sm:$0xf]
    %v345 = vld [vmem:[%s2 + $0x30] sm:$0xf]
    %v346 = vld [vmem:[%s2 + $0x34] sm:$0xf]
    %v347 = vld [vmem:[%s2 + $0x38] sm:$0xf]
    %v348 = vld [vmem:[%s2 + $0x3c] sm:$0xf]
    %v349 = vld [vmem:[%s2 + $0x40] sm:$0xf]
    %v350 = vld [vmem:[%s2 + $0x44] sm:$0xf]
    %v351 = vld [vmem:[%s2 + $0x48] sm:$0xf]
    %v352 = vld [vmem:[%s2 + $0x4c] sm:$0xf]
    %v353 = vld [vmem:[%s2 + $0x50] sm:$0xf]
    %v354 = vld [vmem:[%s2 + $0x54] sm:$0xf]
    %v355 = vld [vmem:[%s2 + $0x58] sm:$0xf]
    %v356 = vld [vmem:[%s2 + $0x5c] sm:$0xf]
    %v381 = vunpack.c.l.b16 %v333
    %v382 = vunpack.c.l.b16 %v334
    %v383 = vunpack.c.l.b16 %v335
    %v384 = vunpack.c.l.b16 %v336
    %v385 = vunpack.c.l.b16 %v337
    %v386 = vunpack.c.l.b16 %v338
    %v387 = vunpack.c.l.b16 %v339
    %v388 = vunpack.c.l.b16 %v340
    %v389 = vunpack.c.l.b16 %v341
    %v390 = vunpack.c.l.b16 %v342
    %v391 = vunpack.c.l.b16 %v343
    %v392 = vunpack.c.l.b16 %v344
    %v393 = vunpack.c.l.b16 %v345
    %v394 = vunpack.c.l.b16 %v346
    %v395 = vunpack.c.l.b16 %v347
    %v396 = vunpack.c.l.b16 %v348
    %v397 = vunpack.c.l.b16 %v349
    %v398 = vunpack.c.l.b16 %v350
    %v399 = vunpack.c.l.b16 %v351
    %v400 = vunpack.c.l.b16 %v352
    %v401 = vunpack.c.l.b16 %v353
    %v402 = vunpack.c.l.b16 %v354
    %v403 = vunpack.c.l.b16 %v355
    %v404 = vunpack.c.l.b16 %v356
    %v405 = vpack.c.b16 %v382, %v381
    %v406 = vpack.c.b16 %v384, %v383
    %v407 = vpack.c.b16 %v386, %v385
    %v408 = vpack.c.b16 %v388, %v387
    %v409 = vpack.c.b16 %v390, %v389
    %v410 = vpack.c.b16 %v392, %v391
    %v411 = vpack.c.b16 %v394, %v393
    %v412 = vpack.c.b16 %v396, %v395
    %v413 = vpack.c.b16 %v398, %v397
    %v414 = vpack.c.b16 %v400, %v399
    %v415 = vpack.c.b16 %v402, %v401
    %v416 = vpack.c.b16 %v404, %v403
    %v430 = vsel %vm34, %v330, 0
    %v433 = vsel %vm34, %v332, 0
    %435 = vmatprep.subr.bf16.mxu0 0
    %436 = vmatpush1.bf16.msra.mxu0 %v412
    %437 = vmatprep.subr.bf16.mxu0 0
    %438 = vmatpush1.bf16.msra.mxu0 %v411
    %439 = vmatprep.subr.bf16.mxu0 0
    %440 = vmatpush1.bf16.msra.mxu0 %v410
    %441 = vmatprep.subr.bf16.mxu0 0
    %442 = vmatpush1.bf16.msra.mxu0 %v409
    %443 = vmatprep.subr.bf16.mxu0 0
    %444 = vmatpush1.bf16.msra.mxu0 %v408
    %445 = vmatprep.subr.bf16.mxu0 0
    %446 = vmatpush1.bf16.msra.mxu0 %v407
    %447 = vmatprep.subr.bf16.mxu0 0
    %448 = vmatpush1.bf16.msra.mxu0 %v406
    %449 = vmatprep.subr.bf16.mxu0 0
    %450 = vmatpush1.bf16.msra.mxu0 %v405
    %451 = vmatprep.subr.bf16.mxu0 0
    %452 = vmatpush2.bf16.msra.mxu0 0
    %453 = vmatprep.subr.bf16.mxu0 0
    %454 = vmatpush2.bf16.msra.mxu0 0
    %455 = vmatprep.subr.bf16.mxu0 0
    %456 = vmatpush2.bf16.msra.mxu0 0
    %457 = vmatprep.subr.bf16.mxu0 0
    %458 = vmatpush2.bf16.msra.mxu0 0
    %459 = vmatprep.subr.bf16.mxu0 0
    %460 = vmatpush2.bf16.msra.mxu0 %v416
    %461 = vmatprep.subr.bf16.mxu0 0
    %462 = vmatpush2.bf16.msra.mxu0 %v415
    %463 = vmatprep.subr.bf16.mxu0 0
    %464 = vmatpush2.bf16.msra.mxu0 %v414
    %465 = vmatprep.subr.bf16.mxu0 0
    %466 = vmatpush2.bf16.msra.mxu0 %v413
    %467 = vmatprep.mubr.bf16.mxu0 %v430
    %468 = vmatmul.mubr.bf16.gmra.mxu0 %v329
    %v469 = vpop.f32.mrf.mxu0
    %v470 = vadd.f32 0.0, %v469
    %v471 = vpop.f32.mrf.mxu0
    %v472 = vpop.f32.mrf.mxu0
    %v473 = vadd.f32 0.0, %v472
    %v474 = vpop.f32.mrf.mxu0
    %475 = vmatprep.mubr.bf16.mxu0 %v433
    %476 = vmatmul.mubr.bf16.gmra.mxu0 %v331
    %v477 = vpop.f32.mrf.mxu0
    %v478 = vadd.f32 0.0, %v477
    %v479 = vpop.f32.mrf.mxu0
    %v480 = vpop.f32.mrf.mxu0
    %v481 = vadd.f32 0.0, %v480
    %v482 = vpop.f32.mrf.mxu0
    %483 = vdwg.mxu0
    %488 = vrot.lane.b32.xlu0 %v470, 64
    %v489 = vpop.permute.xlu0 %488
    %490 = vrot.lane.b32.xlu0 %v473, 64
    %v491 = vpop.permute.xlu0 %490
    %492 = vrot.lane.b32.xlu0 %v478, 64
    %v493 = vpop.permute.xlu0 %492
    %494 = vrot.lane.b32.xlu0 %v481, 64
    %v495 = vpop.permute.xlu0 %494
    %v500 = vadd.f32 %v252, %v489
    %v501 = vadd.f32 %v255, %v491
    %v502 = vadd.f32 %v260, %v493
    %v503 = vadd.f32 %v263, %v495
    %504 = vst.msk [vmem:[#allocation2] sm:$0xff] %vm52, %v500
    %505 = vst.msk [vmem:[#allocation2 + $0x10] sm:$0xff] %vm52, %v501
    %506 = vst.msk [vmem:[#allocation2 + $0x20] sm:$0xff] %vm52, %v502
    %507 = vst.msk [vmem:[#allocation2 + $0x30] sm:$0xff] %vm52, %v503
    %v510 = vrot.slane %v500, 7
    %v511 = vrot.slane %v501, 7
    %v512 = vsel %vm290, %v510, %v511
    %513 = vrot.lane.b32.xlu0 %v510, 64
    %v514 = vpop.permute.xlu0 %513
    %515 = vrot.lane.b32.xlu0 %v512, 64
    %v516 = vpop.permute.xlu0 %515
    %519 = vst.msk [vmem:[#allocation2] sm:$0xfe] %vm296, %v514
    %520 = vst.msk [vmem:[#allocation2 + $0x10] sm:$0xff] %vm34, %v516
    %v521 = vrot.slane %v500, 1
    %v522 = vrot.slane %v501, 1
    %v523 = vsel %vm40, %v521, %v522
    %524 = vrot.lane.b32.xlu0 %v523, 64
    %v525 = vpop.permute.xlu0 %524
    %526 = vrot.lane.b32.xlu0 %v522, 64
    %v527 = vpop.permute.xlu0 %526
    %530 = vst.msk [vmem:[#allocation2 + $0x8] sm:$0xff] %vm34, %v525
    %531 = vst.msk [vmem:[#allocation2 + $0x18] sm:$0x7f] %vm305, %v527
    %v534 = vrot.slane %v502, 7
    %v535 = vrot.slane %v503, 7
    %v536 = vsel %vm290, %v534, %v535
    %537 = vrot.lane.b32.xlu0 %v534, 64
    %v538 = vpop.permute.xlu0 %537
    %539 = vrot.lane.b32.xlu0 %v536, 64
    %v540 = vpop.permute.xlu0 %539
    %543 = vst.msk [vmem:[#allocation2 + $0x20] sm:$0xfe] %vm296, %v538
    %544 = vst.msk [vmem:[#allocation2 + $0x30] sm:$0xff] %vm34, %v540
    %v545 = vrot.slane %v502, 1
    %v546 = vrot.slane %v503, 1
    %v547 = vsel %vm40, %v545, %v546
    %548 = vrot.lane.b32.xlu0 %v547, 64
    %v549 = vpop.permute.xlu0 %548
    %550 = vrot.lane.b32.xlu0 %v546, 64
    %v551 = vpop.permute.xlu0 %550
    %554 = vst.msk [vmem:[#allocation2 + $0x28] sm:$0xff] %vm34, %v549
    %555 = vst.msk [vmem:[#allocation2 + $0x38] sm:$0x7f] %vm305, %v551
    %v556 = vld [vmem:[#allocation2] sm:$0xff]
    %v557 = vld [vmem:[#allocation2 + $0x8] sm:$0xff]
    %v558 = vld [vmem:[#allocation2 + $0x10] sm:$0xff]
    %v559 = vld [vmem:[#allocation2 + $0x18] sm:$0xff]
    %v560 = vld [vmem:[#allocation2 + $0x20] sm:$0xff]
    %v561 = vld [vmem:[#allocation2 + $0x28] sm:$0xff]
    %v562 = vld [vmem:[#allocation2 + $0x30] sm:$0xff]
    %v563 = vld [vmem:[#allocation2 + $0x38] sm:$0xff]
    %v564 = vpack.c.bf16 %v558, %v556
    %v565 = vpack.c.bf16 %v559, %v557
    %v566 = vpack.c.bf16 %v562, %v560
    %v567 = vpack.c.bf16 %v563, %v561
    %v568 = vld [vmem:[%s3] sm:$0xf]
    %v569 = vld [vmem:[%s3 + $0x4] sm:$0xf]
    %v570 = vld [vmem:[%s3 + $0x8] sm:$0xf]
    %v571 = vld [vmem:[%s3 + $0xc] sm:$0xf]
    %v572 = vld [vmem:[%s3 + $0x10] sm:$0xf]
    %v573 = vld [vmem:[%s3 + $0x14] sm:$0xf]
    %v574 = vld [vmem:[%s3 + $0x18] sm:$0xf]
    %v575 = vld [vmem:[%s3 + $0x1c] sm:$0xf]
    %v576 = vld [vmem:[%s3 + $0x20] sm:$0xf]
    %v577 = vld [vmem:[%s3 + $0x24] sm:$0xf]
    %v578 = vld [vmem:[%s3 + $0x28] sm:$0xf]
    %v579 = vld [vmem:[%s3 + $0x2c] sm:$0xf]
    %v580 = vld [vmem:[%s3 + $0x30] sm:$0xf]
    %v581 = vld [vmem:[%s3 + $0x34] sm:$0xf]
    %v582 = vld [vmem:[%s3 + $0x38] sm:$0xf]
    %v583 = vld [vmem:[%s3 + $0x3c] sm:$0xf]
    %v584 = vld [vmem:[%s3 + $0x40] sm:$0xf]
    %v585 = vld [vmem:[%s3 + $0x44] sm:$0xf]
    %v586 = vld [vmem:[%s3 + $0x48] sm:$0xf]
    %v587 = vld [vmem:[%s3 + $0x4c] sm:$0xf]
    %v588 = vld [vmem:[%s3 + $0x50] sm:$0xf]
    %v589 = vld [vmem:[%s3 + $0x54] sm:$0xf]
    %v590 = vld [vmem:[%s3 + $0x58] sm:$0xf]
    %v591 = vld [vmem:[%s3 + $0x5c] sm:$0xf]
    %v592 = vld [vmem:[%s6] sm:$0x1]
    %v594 = vlaneseq
    %v595 = vshrl.u32 %v594, 7
    %v596 = vsub.s32 0, %v595
    %v597 = vrot.slane %v592, %v596
    %v623 = vunpack.c.l.b16 %v568
    %v624 = vunpack.c.l.b16 %v569
    %v625 = vunpack.c.l.b16 %v570
    %v626 = vunpack.c.l.b16 %v571
    %v627 = vunpack.c.l.b16 %v572
    %v628 = vunpack.c.l.b16 %v573
    %v629 = vunpack.c.l.b16 %v574
    %v630 = vunpack.c.l.b16 %v575
    %v631 = vunpack.c.l.b16 %v576
    %v632 = vunpack.c.l.b16 %v577
    %v633 = vunpack.c.l.b16 %v578
    %v634 = vunpack.c.l.b16 %v579
    %v635 = vunpack.c.l.b16 %v580
    %v636 = vunpack.c.l.b16 %v581
    %v637 = vunpack.c.l.b16 %v582
    %v638 = vunpack.c.l.b16 %v583
    %v639 = vunpack.c.l.b16 %v584
    %v640 = vunpack.c.l.b16 %v585
    %v641 = vunpack.c.l.b16 %v586
    %v642 = vunpack.c.l.b16 %v587
    %v643 = vunpack.c.l.b16 %v588
    %v644 = vunpack.c.l.b16 %v589
    %v645 = vunpack.c.l.b16 %v590
    %v646 = vunpack.c.l.b16 %v591
    %v647 = vpack.c.b16 %v624, %v623
    %v648 = vpack.c.b16 %v626, %v625
    %v649 = vpack.c.b16 %v628, %v627
    %v650 = vpack.c.b16 %v630, %v629
    %v651 = vpack.c.b16 %v632, %v631
    %v652 = vpack.c.b16 %v634, %v633
    %v653 = vpack.c.b16 %v636, %v635
    %v654 = vpack.c.b16 %v638, %v637
    %v655 = vpack.c.b16 %v640, %v639
    %v656 = vpack.c.b16 %v642, %v641
    %v657 = vpack.c.b16 %v644, %v643
    %v658 = vpack.c.b16 %v646, %v645
    %v672 = vsel %vm34, %v565, 0
    %v675 = vsel %vm34, %v567, 0
    %677 = vmatprep.subr.bf16.mxu0 0
    %678 = vmatpush1.bf16.msra.mxu0 %v654
    %679 = vmatprep.subr.bf16.mxu0 0
    %680 = vmatpush1.bf16.msra.mxu0 %v653
    %681 = vmatprep.subr.bf16.mxu0 0
    %682 = vmatpush1.bf16.msra.mxu0 %v652
    %683 = vmatprep.subr.bf16.mxu0 0
    %684 = vmatpush1.bf16.msra.mxu0 %v651
    %685 = vmatprep.subr.bf16.mxu0 0
    %686 = vmatpush1.bf16.msra.mxu0 %v650
    %687 = vmatprep.subr.bf16.mxu0 0
    %688 = vmatpush1.bf16.msra.mxu0 %v649
    %689 = vmatprep.subr.bf16.mxu0 0
    %690 = vmatpush1.bf16.msra.mxu0 %v648
    %691 = vmatprep.subr.bf16.mxu0 0
    %692 = vmatpush1.bf16.msra.mxu0 %v647
    %693 = vmatprep.subr.bf16.mxu0 0
    %694 = vmatpush2.bf16.msra.mxu0 0
    %695 = vmatprep.subr.bf16.mxu0 0
    %696 = vmatpush2.bf16.msra.mxu0 0
    %697 = vmatprep.subr.bf16.mxu0 0
    %698 = vmatpush2.bf16.msra.mxu0 0
    %699 = vmatprep.subr.bf16.mxu0 0
    %700 = vmatpush2.bf16.msra.mxu0 0
    %701 = vmatprep.subr.bf16.mxu0 0
    %702 = vmatpush2.bf16.msra.mxu0 %v658
    %703 = vmatprep.subr.bf16.mxu0 0
    %704 = vmatpush2.bf16.msra.mxu0 %v657
    %705 = vmatprep.subr.bf16.mxu0 0
    %706 = vmatpush2.bf16.msra.mxu0 %v656
    %707 = vmatprep.subr.bf16.mxu0 0
    %708 = vmatpush2.bf16.msra.mxu0 %v655
    %709 = vmatprep.mubr.bf16.mxu0 %v672
    %710 = vmatmul.mubr.bf16.gmra.mxu0 %v564
    %v711 = vpop.f32.mrf.mxu0
    %v712 = vadd.f32 %v597, %v711
    %v713 = vpop.f32.mrf.mxu0
    %v714 = vpop.f32.mrf.mxu0
    %v715 = vadd.f32 %v597, %v714
    %v716 = vpop.f32.mrf.mxu0
    %717 = vmatprep.mubr.bf16.mxu0 %v675
    %718 = vmatmul.mubr.bf16.gmra.mxu0 %v566
    %v719 = vpop.f32.mrf.mxu0
    %v720 = vadd.f32 %v597, %v719
    %v721 = vpop.f32.mrf.mxu0
    %v722 = vpop.f32.mrf.mxu0
    %v723 = vadd.f32 %v597, %v722
    %v724 = vpop.f32.mrf.mxu0
    %725 = vdwg.mxu0
    %v726 = vmax.f32 %v712, 0.0
    %v727 = vmax.f32 %v715, 0.0
    %v728 = vmax.f32 %v720, 0.0
    %v729 = vmax.f32 %v723, 0.0
    %v730 = vpack.c.bf16 %v727, %v726
    %v731 = vpack.c.bf16 %v729, %v728
    %v732 = vld [vmem:[%s4] sm:$0xf]
    %v733 = vld [vmem:[%s4 + $0x4] sm:$0xf]
    %v734 = vld [vmem:[%s4 + $0x8] sm:$0xf]
    %v735 = vld [vmem:[%s4 + $0xc] sm:$0xf]
    %v736 = vld [vmem:[%s4 + $0x10] sm:$0xf]
    %v737 = vld [vmem:[%s4 + $0x14] sm:$0xf]
    %v738 = vld [vmem:[%s4 + $0x18] sm:$0xf]
    %v739 = vld [vmem:[%s4 + $0x1c] sm:$0xf]
    %v740 = vld [vmem:[%s7] sm:$0x1]
    %v742 = vlaneseq
    %v743 = vshrl.u32 %v742, 7
    %v744 = vsub.s32 0, %v743
    %v745 = vrot.slane %v740, %v744
    %v755 = vunpack.c.l.b16 %v732
    %v756 = vunpack.c.l.b16 %v733
    %v757 = vunpack.c.l.b16 %v734
    %v758 = vunpack.c.l.b16 %v735
    %v759 = vunpack.c.l.b16 %v736
    %v760 = vunpack.c.l.b16 %v737
    %v761 = vunpack.c.l.b16 %v738
    %v762 = vunpack.c.l.b16 %v739
    %v763 = vpack.c.b16 %v756, %v755
    %v764 = vpack.c.b16 %v758, %v757
    %v765 = vpack.c.b16 %v760, %v759
    %v766 = vpack.c.b16 %v762, %v761
    %v772 = vsel %vm34, %v730, 0
    %v775 = vsel %vm34, %v731, 0
    %777 = vmatprep.subr.bf16.mxu0 0
    %778 = vmatpush1.bf16.msra.mxu0 0
    %779 = vmatprep.subr.bf16.mxu0 0
    %780 = vmatpush1.bf16.msra.mxu0 0
    %781 = vmatprep.subr.bf16.mxu0 0
    %782 = vmatpush1.bf16.msra.mxu0 0
    %783 = vmatprep.subr.bf16.mxu0 0
    %784 = vmatpush1.bf16.msra.mxu0 0
    %785 = vmatprep.subr.bf16.mxu0 0
    %786 = vmatpush1.bf16.msra.mxu0 %v766
    %787 = vmatprep.subr.bf16.mxu0 0
    %788 = vmatpush1.bf16.msra.mxu0 %v765
    %789 = vmatprep.subr.bf16.mxu0 0
    %790 = vmatpush1.bf16.msra.mxu0 %v764
    %791 = vmatprep.subr.bf16.mxu0 0
    %792 = vmatpush1.bf16.msra.mxu0 %v763
    %793 = vmatprep.subr.bf16.mxu0 0
    %794 = vmatpush2.bf16.msra.mxu0 0
    %795 = vmatprep.subr.bf16.mxu0 0
    %796 = vmatpush2.bf16.msra.mxu0 0
    %797 = vmatprep.subr.bf16.mxu0 0
    %798 = vmatpush2.bf16.msra.mxu0 0
    %799 = vmatprep.subr.bf16.mxu0 0
    %800 = vmatpush2.bf16.msra.mxu0 0
    %801 = vmatprep.subr.bf16.mxu0 0
    %802 = vmatpush2.bf16.msra.mxu0 0
    %803 = vmatprep.subr.bf16.mxu0 0
    %804 = vmatpush2.bf16.msra.mxu0 0
    %805 = vmatprep.subr.bf16.mxu0 0
    %806 = vmatpush2.bf16.msra.mxu0 0
    %807 = vmatprep.subr.bf16.mxu0 0
    %808 = vmatpush2.bf16.msra.mxu0 0
    %809 = vmatprep.mubr.bf16.mxu0 0
    %810 = vmatmul.mubr.bf16.gmra.mxu0 %v772
    %v811 = vpop.f32.mrf.mxu0
    %v812 = vadd.f32 %v745, %v811
    %v813 = vpop.f32.mrf.mxu0
    %v814 = vpop.f32.mrf.mxu0
    %v815 = vadd.f32 %v745, %v814
    %v816 = vpop.f32.mrf.mxu0
    %817 = vmatprep.mubr.bf16.mxu0 0
    %818 = vmatmul.mubr.bf16.gmra.mxu0 %v775
    %v819 = vpop.f32.mrf.mxu0
    %v820 = vadd.f32 %v745, %v819
    %v821 = vpop.f32.mrf.mxu0
    %v822 = vpop.f32.mrf.mxu0
    %v823 = vadd.f32 %v745, %v822
    %v824 = vpop.f32.mrf.mxu0
    %825 = vdwg.mxu0
    %v826 = vxor.u32 %v812, 2147483648
    %v827 = vxor.u32 %v815, 2147483648
    %v828 = vxor.u32 %v820, 2147483648
    %v829 = vxor.u32 %v823, 2147483648
    %v830 = vmul.f32 %v826, 1.442695
    %v831 = vpow.pop %v830
    %v832 = vmul.f32 %v827, 1.442695
    %v833 = vpow.pop %v832
    %v834 = vmul.f32 %v828, 1.442695
    %v835 = vpow.pop %v834
    %v836 = vmul.f32 %v829, 1.442695
    %v837 = vpow.pop %v836
    %v838 = vadd.f32 %v831, 1.0
    %v839 = vadd.f32 %v833, 1.0
    %v840 = vadd.f32 %v835, 1.0
    %v841 = vadd.f32 %v837, 1.0
    %v842 = vrcp.pop %v838
    %v843 = vmul.f32 1.0, %v842
    %v844 = vrcp.pop %v839
    %v845 = vmul.f32 1.0, %v844
    %v846 = vrcp.pop %v840
    %v847 = vmul.f32 1.0, %v846
    %v848 = vrcp.pop %v841
    %v849 = vmul.f32 1.0, %v848
    %850 = vrot.lane.b32.xlu0 %v500, 64
    %v851 = vpop.permute.xlu0 %850
    %852 = vrot.lane.b32.xlu0 %v501, 64
    %v853 = vpop.permute.xlu0 %852
    %854 = vrot.lane.b32.xlu0 %v502, 64
    %v855 = vpop.permute.xlu0 %854
    %856 = vrot.lane.b32.xlu0 %v503, 64
    %v857 = vpop.permute.xlu0 %856
    %v862 = vmul.f32 %v843, %v851
    %v863 = vmul.f32 %v845, %v853
    %v864 = vmul.f32 %v847, %v855
    %v865 = vmul.f32 %v849, %v857
    %v868 = vadd.f32 %v862, %v43
    %v869 = vadd.f32 %v863, %v45
    %870 = vst.msk [vmem:[#allocation3] sm:$0xff] %vm34, %v868
    %871 = vst.msk [vmem:[#allocation3 + $0x8] sm:$0xff] %vm34, %v869
    %v874 = vadd.f32 %v864, %v76
    %v875 = vadd.f32 %v865, %v78
    %878 = vrot.lane.b32.xlu0 %v874, 64
    %v879 = vpop.permute.xlu0 %878
    %880 = vrot.lane.b32.xlu0 %v875, 64
    %v881 = vpop.permute.xlu0 %880
    %884 = vst.msk [vmem:[#allocation3] sm:$0xff] %vm52, %v879
    %885 = vst.msk [vmem:[#allocation3 + $0x8] sm:$0xff] %vm52, %v881
    // Predicated region
    $region34: #{tpu_custom_call.1} parent=1 // pred_check
      _
    $region35: #{tpu_custom_call.1} parent=1 // pred_check_branch
      %887 = sbr.rel (0) target = $region37
    $region36: #{tpu_custom_call.1} parent=1 // pred_region
      %s889 = ssub.s32 256, 256
      %890 = vsyncadd [#allocation4], %s889
      %s891 = sshll.u32 [#allocation3], 4
      %s892 = int_to_ptr.vmem [resolvable:$true] %s891
      %897 = dma.vmem_to_hbm [thread:$0]  %s892, 256, %s8, [#allocation4], 128, 128, 8
    $region37: #{tpu_custom_call.1} parent=1 // pred_fallthru
      _
    // Predicated region
    $region38: #{tpu_custom_call.1} parent=1 // pred_check
      _
    $region39: #{tpu_custom_call.1} parent=1 // pred_check_branch
      %899 = sbr.rel (0) target = $region41
    $region40: #{tpu_custom_call.1} parent=1 // pred_region
      %900 = dma.done [#allocation4], 256
    $region41: #{tpu_custom_call.1} parent=1 // pred_fallthru
      _
    %901 = vsyncpa [#allocation4], 1

</llo_original>
